<compile_context>
chip_gen: v7x
topology: tpu7x:2x2x1
jax: 0.10.0
libtpu: 0.0.40
codegen_flags: <defaults>
</compile_context>

<pallas_src>
import functools

import jax
import jax.numpy as jnp
from jax import lax
from jax.experimental import pallas as pl
from jax.experimental.pallas import tpu as pltpu


def _round_up(x, m):
    return (x + m - 1) // m * m


# ----------------------------------------------------------------------------- kernels
def _mm_bias_relu6_single_k(x_ref, w_ref, bias_ref, o_ref):
    """Whole-K matmul + bias + ReLU6 in one shot (no accumulator scratch, no pl.when)."""
    y = jnp.dot(x_ref[...], w_ref[...], preferred_element_type=jnp.float32)
    y = y + bias_ref[...]
    o_ref[...] = jnp.clip(y, 0.0, 6.0).astype(o_ref.dtype)


def _mm_bias_relu6_multi_k(x_ref, w_ref, bias_ref, o_ref, acc_ref):
    """K-tiled matmul with f32 VMEM accumulator; fused bias + ReLU6 on the last K step."""
    @pl.when(pl.program_id(2) == 0)
    def _init():
        acc_ref[...] = jnp.zeros_like(acc_ref)

    acc_ref[...] += jnp.dot(
        x_ref[...], w_ref[...], preferred_element_type=jnp.float32
    )

    @pl.when(pl.program_id(2) == pl.num_programs(2) - 1)
    def _finalize():
        y = acc_ref[...] + bias_ref[...]  # BN scale already folded into weights
        o_ref[...] = jnp.clip(y, 0.0, 6.0).astype(o_ref.dtype)


# ----------------------------------------------------------------------------- tiling
def _choose_tiles(M, K, Cout):
    # Lane (N) tile: 256 fills the 256-wide v6e/v7x MXU; 128 avoids 2x padding for small Cout.
    tn = 256 if Cout > 128 else 128
    Cp = _round_up(Cout, tn)

    # K tile: a single k-step whenever K fits in one 512-wide tile (true for stem layers),
    # otherwise 512-wide K tiles.
    Kp128 = _round_up(K, 128)
    tk = Kp128 if Kp128 <= 512 else 512
    Kp = _round_up(K, tk)

    # M tile: large tiles amortize the ~0.35us per-grid-step overhead, but keep at least two
    # "parallel" grid steps when M allows so v7x's two TensorCores both get work.
    if M <= 256:
        tm = _round_up(M, 8)
    else:
        tm = 512
        if (_round_up(M, tm) // tm) * (Cp // tn) < 2:
            tm = 256
    Mp = _round_up(M, tm)
    return tm, tn, tk, Mp, Kp, Cp


def _fused_matmul(patches, w_folded, bias, out_dtype):
    """patches: (M, K); w_folded: (K, Cout); bias: (Cout,). Returns (M, Cout) out_dtype."""
    M, K = patches.shape
    Kw, Cout = w_folded.shape
    assert K == Kw
    tm, tn, tk, Mp, Kp, Cp = _choose_tiles(M, K, Cout)

    # jnp.pad (single pad op) instead of zeros + dynamic-update-slice; zero K columns are
    # inert, padded M rows / Cout columns are sliced away afterwards.
    x_p = jnp.pad(patches, ((0, Mp - M), (0, Kp - K)))
    w_p = jnp.pad(w_folded, ((0, Kp - K), (0, Cp - Cout)))
    b_p = jnp.pad(bias.astype(jnp.float32).reshape(1, Cout), ((0, 0), (0, Cp - Cout)))

    n_k = Kp // tk
    if n_k == 1:
        grid = (Mp // tm, Cp // tn)
        in_specs = [
            pl.BlockSpec((tm, Kp), lambda i, j: (i, 0)),   # im2col patches
            pl.BlockSpec((Kp, tn), lambda i, j: (0, j)),   # folded weights
            pl.BlockSpec((1, tn), lambda i, j: (0, j)),    # folded bias
        ]
        out_specs = pl.BlockSpec((tm, tn), lambda i, j: (i, j))
        kernel = _mm_bias_relu6_single_k
        scratch = []
        dims = ("parallel", "parallel")
    else:
        grid = (Mp // tm, Cp // tn, n_k)
        in_specs = [
            pl.BlockSpec((tm, tk), lambda i, j, k: (i, k)),
            pl.BlockSpec((tk, tn), lambda i, j, k: (k, j)),
            pl.BlockSpec((1, tn), lambda i, j, k: (0, j)),
        ]
        out_specs = pl.BlockSpec((tm, tn), lambda i, j, k: (i, j))
        kernel = _mm_bias_relu6_multi_k
        scratch = [pltpu.VMEM((tm, tn), jnp.float32)]
        dims = ("parallel", "parallel", "arbitrary")

    out = pl.pallas_call(
        kernel,
        out_shape=jax.ShapeDtypeStruct((Mp, Cp), out_dtype),
        grid_spec=pltpu.PrefetchScalarGridSpec(
            num_scalar_prefetch=0,
            grid=grid,
            in_specs=in_specs,
            out_specs=out_specs,
            scratch_shapes=scratch,
        ),
        compiler_params=pltpu.CompilerParams(
            dimension_semantics=dims,
            vmem_limit_bytes=32 * 1024 * 1024,
        ),
    )(x_p, w_p, b_p)

    return out[:M, :Cout]


# ----------------------------------------------------------------------------- wrappers
@functools.partial(
    jax.jit, static_argnames=("padding", "stride", "eps", "compute_dtype", "out_dtype"))
def conv_block_forward_nhwc(x_nhwc, conv_w, conv_b, bn_gamma, bn_beta, bn_mean, bn_var,
                            *, padding=1, stride=1, eps=1e-5,
                            compute_dtype=jnp.bfloat16, out_dtype=None):
    """NHWC entry point (preferred: no layout transposes). conv_w is OIHW (PyTorch layout)."""
    N, H, W, Cin = x_nhwc.shape
    Cout, _, KH, KW = conv_w.shape
    Ho = (H + 2 * padding - KH) // stride + 1
    Wo = (W + 2 * padding - KW) // stride + 1
    if out_dtype is None:
        out_dtype = x_nhwc.dtype   # pass jnp.bfloat16 to halve writeback (output is in [0,6])

    # Fold conv bias + BatchNorm (inference, running stats) into per-channel scale/bias, then
    # fold the scale into the weights so the in-kernel epilogue is just add + clip.
    inv_std = lax.rsqrt(bn_var.astype(jnp.float32) + eps)
    scale = bn_gamma.astype(jnp.float32) * inv_std                       # (Cout,)
    bias = bn_beta.astype(jnp.float32) + scale * (
        conv_b.astype(jnp.float32) - bn_mean.astype(jnp.float32))        # (Cout,)
    w_hwio = jnp.transpose(conv_w, (2, 3, 1, 0)).astype(jnp.float32)     # (KH,KW,Cin,Cout)
    w_folded = (w_hwio.reshape(KH * KW * Cin, Cout) * scale[None, :]).astype(compute_dtype)

    # Cast activations to the MXU operand dtype BEFORE im2col/padding: the patches slab is the
    # dominant HBM intermediate, so building it narrow halves the kernel's input traffic.
    x = x_nhwc.astype(compute_dtype)

    if KH == 1 and KW == 1 and padding == 0:
        # 1x1 conv: no im2col blowup at all.
        patches = x[:, ::stride, ::stride, :].reshape(N * Ho * Wo, Cin)
    else:
        x_pad = jnp.pad(x, ((0, 0), (padding, padding), (padding, padding), (0, 0)))
        # TODO(synk): replace this wrapper-side im2col with in-kernel window expansion
        # (halo-tiled row strips / manual DMA) to remove the KH*KW x input read blowup.
        windows = []
        for kh in range(KH):
            for kw in range(KW):
                windows.append(
                    x_pad[:,
                          kh: kh + (Ho - 1) * stride + 1: stride,
                          kw: kw + (Wo - 1) * stride + 1: stride,
                          :])
        patches = jnp.concatenate(windows, axis=-1)          # (N, Ho, Wo, KH*KW*Cin)
        patches = patches.reshape(N * Ho * Wo, KH * KW * Cin)

    out_flat = _fused_matmul(patches, w_folded, bias, out_dtype)   # (N*Ho*Wo, Cout)
    return out_flat.reshape(N, Ho, Wo, Cout)


@functools.partial(
    jax.jit, static_argnames=("padding", "stride", "eps", "compute_dtype", "out_dtype"))
def conv_block_forward(x_nchw, conv_w, conv_b, bn_gamma, bn_beta, bn_mean, bn_var,
                       *, padding=1, stride=1, eps=1e-5,
                       compute_dtype=jnp.bfloat16, out_dtype=None):
    """Module-faithful NCHW wrapper around the NHWC path (PyTorch layout in/out)."""
    x_nhwc = jnp.transpose(x_nchw, (0, 2, 3, 1))
    out_nhwc = conv_block_forward_nhwc(
        x_nhwc, conv_w, conv_b, bn_gamma, bn_beta, bn_mean, bn_var,
        padding=padding, stride=stride, eps=eps,
        compute_dtype=compute_dtype, out_dtype=out_dtype)
    return jnp.transpose(out_nhwc, (0, 3, 1, 2))


def reference_forward(x_nchw, conv_w, conv_b, bn_gamma, bn_beta,
                      bn_mean, bn_var, *, padding=1, stride=1, eps=1e-5):
    z = lax.conv_general_dilated(
        x_nchw, conv_w, window_strides=(stride, stride),
        padding=((padding, padding), (padding, padding)),
        dimension_numbers=("NCHW", "OIHW", "NCHW"))
    z = z + conv_b.reshape(1, -1, 1, 1)
    z = (z - bn_mean.reshape(1, -1, 1, 1)) / jnp.sqrt(bn_var.reshape(1, -1, 1, 1) + eps)
    z = z * bn_gamma.reshape(1, -1, 1, 1) + bn_beta.reshape(1, -1, 1, 1)
    return jnp.clip(z, 0.0, 6.0)


def _make_params(key, Cin, Cout, KH, KW):
    k_w, k_b, k_g, k_be, k_m, k_v = jax.random.split(key, 6)
    conv_w = jax.random.normal(k_w, (Cout, Cin, KH, KW), dtype=jnp.float32) * 0.1
    conv_b = jax.random.normal(k_b, (Cout,), dtype=jnp.float32) * 0.1
    bn_gamma = 1.0 + 0.1 * jax.random.normal(k_g, (Cout,), dtype=jnp.float32)
    bn_beta = 0.1 * jax.random.normal(k_be, (Cout,), dtype=jnp.float32)
    bn_mean = 0.1 * jax.random.normal(k_m, (Cout,), dtype=jnp.float32)
    bn_var = jnp.abs(jax.random.normal(k_v, (Cout,), dtype=jnp.float32)) + 0.5
    return conv_w, conv_b, bn_gamma, bn_beta, bn_mean, bn_var


if __name__ == "__main__":
    key = jax.random.PRNGKey(0)
    k1, k2, k3, k4 = jax.random.split(key, 4)

    # ---- case 1: conv_block(4, 8, kernel_size=3, padding=1) — single-K-step kernel path ----
    N, Cin, H, W = 2, 4, 16, 16
    Cout, KH, KW, padding = 8, 3, 3, 1
    x = jax.random.normal(k1, (N, Cin, H, W), dtype=jnp.float32)
    params = _make_params(k2, Cin, Cout, KH, KW)
    ref = reference_forward(x, *params, padding=padding)

    # Exact f32 MXU-operand path.
    out_f32 = conv_block_forward(x, *params, padding=padding, compute_dtype=jnp.float32)
    out_f32 = jax.block_until_ready(out_f32)
    assert out_f32.shape == (N, Cout, H, W)
    assert jnp.max(jnp.abs(out_f32 - ref)) < 1e-4

    # Default bf16 MXU-operand path (f32 accumulate + epilogue).
    out_bf16 = conv_block_forward(x, *params, padding=padding)
    out_bf16 = jax.block_until_ready(out_bf16)
    assert out_bf16.shape == (N, Cout, H, W)
    assert jnp.max(jnp.abs(out_bf16 - ref)) < 1e-1

    # ---- case 2: wider channels (K = 9*64 = 576 > 512) — exercises the multi-K kernel path ----
    N2, Cin2, H2, W2 = 1, 64, 8, 8
    Cout2 = 32
    x2 = jax.random.normal(k3, (N2, Cin2, H2, W2), dtype=jnp.float32)
    params2 = _make_params(k4, Cin2, Cout2, KH, KW)
    ref2 = reference_forward(x2, *params2, padding=padding)
    out2 = conv_block_forward(x2, *params2, padding=padding)
    out2 = jax.block_until_ready(out2)
    assert out2.shape == (N2, Cout2, H2, W2)
    assert jnp.max(jnp.abs(out2 - ref2)) < 1.5e-1

    print("KERNEL_OK")
</pallas_src>

<mosaic_0001>
module attributes {stable_mosaic.version = 11 : i64} {
  func.func @_mm_bias_relu6_single_k(%arg0: i32, %arg1: i32, %arg2: memref<256x128xf32, #tpu.memory_space<vmem>>, %arg3: memref<128x128xf32, #tpu.memory_space<vmem>>, %arg4: memref<1x128xf32, #tpu.memory_space<vmem>>, %arg5: memref<256x128xf32, #tpu.memory_space<vmem>>) attributes {dimension_semantics = [#tpu.dimension_semantics<parallel>, #tpu.dimension_semantics<parallel>], iteration_bounds = array<i64: 2, 1>, scalar_prefetch = 0 : i64, scratch_operands = 0 : i64, tpu.core_type = #tpu.core_type<tc>, window_params = [{transform_indices = @transform_0, window_bounds = array<i64: 256, 128>}, {transform_indices = @transform_1, window_bounds = array<i64: 128, 128>}, {transform_indices = @transform_2, window_bounds = array<i64: 1, 128>}, {transform_indices = @transform_3, window_bounds = array<i64: 256, 128>}]} {
    %c0 = arith.constant 0 : index
    %c0_0 = arith.constant 0 : index
    %0 = vector.load %arg2[%c0, %c0_0] : memref<256x128xf32, #tpu.memory_space<vmem>>, vector<256x128xf32>
    %c0_1 = arith.constant 0 : index
    %c0_2 = arith.constant 0 : index
    %1 = vector.load %arg3[%c0_1, %c0_2] : memref<128x128xf32, #tpu.memory_space<vmem>>, vector<128x128xf32>
    %cst = arith.constant dense<0.000000e+00> : vector<256x128xf32>
    %2 = tpu.matmul %0, %1, %cst {dimension_numbers = #tpu.dot_dimension_numbers<[1], [0], [0], [1], [0, 0, 1, 1], [], []>} : vector<256x128xf32>, vector<128x128xf32>, vector<256x128xf32> -> vector<256x128xf32>
    %c0_3 = arith.constant 0 : index
    %c0_4 = arith.constant 0 : index
    %3 = vector.load %arg4[%c0_3, %c0_4] : memref<1x128xf32, #tpu.memory_space<vmem>>, vector<1x128xf32>
    %4 = vector.broadcast %3 : vector<1x128xf32> to vector<256x128xf32>
    %5 = arith.addf %2, %4 : vector<256x128xf32>
    %cst_5 = arith.constant 0.000000e+00 : f32
    %cst_6 = arith.constant 6.000000e+00 : f32
    %6 = vector.broadcast %cst_5 : f32 to vector<256x128xf32>
    %7 = arith.maximumf %6, %5 : vector<256x128xf32>
    %8 = vector.broadcast %cst_6 : f32 to vector<256x128xf32>
    %9 = arith.minimumf %8, %7 : vector<256x128xf32>
    %c0_7 = arith.constant 0 : index
    %c0_8 = arith.constant 0 : index
    %10 = vector.load %arg5[%c0_7, %c0_8] : memref<256x128xf32, #tpu.memory_space<vmem>>, vector<256x128xf32>
    tpu.vector_store %arg5[%c0_7, %c0_8], %9 {strides = array<i32>} : memref<256x128xf32, #tpu.memory_space<vmem>>, vector<256x128xf32>,
    return
  }
  func.func @transform_0(%arg0: i32, %arg1: i32) -> (i32, i32) {
    %c0_i32 = arith.constant 0 : i32
    %c0_i32_0 = arith.constant 0 : i32
    return %arg0, %c0_i32 : i32, i32
  }
  func.func @transform_1(%arg0: i32, %arg1: i32) -> (i32, i32) {
    %c0_i32 = arith.constant 0 : i32
    %c0_i32_0 = arith.constant 0 : i32
    return %c0_i32, %arg1 : i32, i32
  }
  func.func @transform_2(%arg0: i32, %arg1: i32) -> (i32, i32) {
    %c0_i32 = arith.constant 0 : i32
    %c0_i32_0 = arith.constant 0 : i32
    return %c0_i32, %arg1 : i32, i32
  }
  func.func @transform_3(%arg0: i32, %arg1: i32) -> (i32, i32) {
    %c0_i32 = arith.constant 0 : i32
    return %arg0, %arg1 : i32, i32
  }
}

</mosaic_0001>

<llo_original>
// kernel: conv_block_forward_nhwc.1
$region0: #{conv_block_forward_nhwc.1}
  #allocation0 [shape = 'u32[]', space=smem, size = 0x4, offset = 0x4, fixed_abs, tag = 'smem constant byte address 0x4 - core index']
  #allocation1 [shape = 'u32[144,128]{1,0:T(1,128)}', space=vmem, size = 0x12000, scoped, tag = 'internal scratch']
  %s0 = inlined_call_operand.vmem [shape: f32[512,128], index: 0, kind: input, shape index: {}]
  %s1 = inlined_call_operand.vmem [shape: f32[128,128], index: 1, kind: input, shape index: {}]
  %s2 = inlined_call_operand.vmem [shape: f32[1,128], index: 2, kind: input, shape index: {}]
  %s3 = inlined_call_operand.vmem [shape: f32[512,128], index: 3, kind: output, shape index: {}]
  %s4 = sld [smem:[#allocation0]]
  $region45: #{conv_block_forward_nhwc.1} parent=0
    _
  %s6 = ssub.s32 1, %s4
  %s7 = scalar_select 0, %s6, %s4
  loop: start=0, step=1, limit=4
  $region2: #{conv_block_forward_nhwc.1} parent=0 // loop_pre_header
    _
  $region3: #{conv_block_forward_nhwc.1} parent=0 // loop_header
    %s9 = sphi 0, %s13
    %p10 = scmp.ge.s32.totalorder %s9, 4
    %s16 = sphi 0, %s28
    %s17 = sphi 0, %s24
    %s18 = sphi 0, %s16
    %s19 = sphi 0, %s17
    %s20 = sphi 0, %s18
    %s21 = sphi 0, %s19
    %s31 = sphi 0, %s33
    %s34 = sphi 0, %s31
    %s35 = sphi 0, %s34
    %s51 = sphi 0, %s35
    %s57 = sphi 0, %s59
    %s60 = sphi 0, %s57
    %s61 = sphi 0, %s60
    %s77 = sphi 0, %s61
    %s83 = sphi 0, %s85
    %s86 = sphi 0, %s83
    %s87 = sphi 0, %s86
    %s103 = sphi 0, %s87
    %s111 = sphi 0, %s113
    %s114 = sphi 0, %s111
    %s115 = sphi 0, %s114
    %s131 = sphi 0, %s115
  $region4: #{conv_block_forward_nhwc.1} parent=0 // loop_header_branch
    %12 = sbr.rel (%p10) target = $region8
  $region5: #{conv_block_forward_nhwc.1} parent=0 // loop_body
    %s14 = ssub.s32 %s9, 1
    %s15 = ssub.s32 %s9, 2
    %s22 = sadd.s32 1, %s17
    %p23 = scmp.ge.s32.totalorder %s22, 1
    %s24 = scalar_select %p23, 0, %s22
    %s25 = sadd.s32 1, %s16
    %s26 = scalar_select %p23, %s25, %s16
    %p27 = scmp.ge.s32.totalorder %s26, 2
    %s28 = scalar_select %p27, 0, %s26
    %s29 = ssub.s32 %s16, %s28
    %p30 = scmp.eq.s32.totalorder %s29, 0
    %s32 = sadd.s32 %s31, 1
    %s33 = scalar_select %p30, %s31, %s32
    %p36 = pneg %p30
    %p37 = scmp.eq.s32.totalorder %s9, 1
    %p38 = por %p36, %p37
    %p39 = scmp.ne.s32.totalorder %s31, %s34
    %p40 = scmp.eq.s32.totalorder %s9, 0
    %p41 = por %p39, %p40
    %p42 = scmp.ne.s32.totalorder %s31, %s34
    %p43 = scmp.eq.s32.totalorder %s14, 1
    %p44 = por %p42, %p43
    %p45 = scmp.ne.s32.totalorder %s34, %s35
    %p46 = scmp.eq.s32.totalorder %s14, 0
    %p47 = por %p45, %p46
    %p48 = scmp.ne.s32.totalorder %s34, %s35
    %p49 = scmp.eq.s32.totalorder %s15, 1
    %p50 = por %p48, %p49
    %p52 = scmp.ne.s32.totalorder %s35, %s51
    %p53 = scmp.eq.s32.totalorder %s15, 0
    %p54 = por %p52, %p53
    %s55 = ssub.s32 %s17, %s24
    %p56 = scmp.eq.s32.totalorder %s55, 0
    %s58 = sadd.s32 %s57, 1
    %s59 = scalar_select %p56, %s57, %s58
    %p62 = pneg %p56
    %p63 = scmp.eq.s32.totalorder %s9, 1
    %p64 = por %p62, %p63
    %p65 = scmp.ne.s32.totalorder %s57, %s60
    %p66 = scmp.eq.s32.totalorder %s9, 0
    %p67 = por %p65, %p66
    %p68 = scmp.ne.s32.totalorder %s57, %s60
    %p69 = scmp.eq.s32.totalorder %s14, 1
    %p70 = por %p68, %p69
    %p71 = scmp.ne.s32.totalorder %s60, %s61
    %p72 = scmp.eq.s32.totalorder %s14, 0
    %p73 = por %p71, %p72
    %p74 = scmp.ne.s32.totalorder %s60, %s61
    %p75 = scmp.eq.s32.totalorder %s15, 1
    %p76 = por %p74, %p75
    %p78 = scmp.ne.s32.totalorder %s61, %s77
    %p79 = scmp.eq.s32.totalorder %s15, 0
    %p80 = por %p78, %p79
    %s81 = ssub.s32 %s17, %s24
    %p82 = scmp.eq.s32.totalorder %s81, 0
    %s84 = sadd.s32 %s83, 1
    %s85 = scalar_select %p82, %s83, %s84
    %p88 = pneg %p82
    %p89 = scmp.eq.s32.totalorder %s9, 1
    %p90 = por %p88, %p89
    %p91 = scmp.ne.s32.totalorder %s83, %s86
    %p92 = scmp.eq.s32.totalorder %s9, 0
    %p93 = por %p91, %p92
    %p94 = scmp.ne.s32.totalorder %s83, %s86
    %p95 = scmp.eq.s32.totalorder %s14, 1
    %p96 = por %p94, %p95
    %p97 = scmp.ne.s32.totalorder %s86, %s87
    %p98 = scmp.eq.s32.totalorder %s14, 0
    %p99 = por %p97, %p98
    %p100 = scmp.ne.s32.totalorder %s86, %s87
    %p101 = scmp.eq.s32.totalorder %s15, 1
    %p102 = por %p100, %p101
    %p104 = scmp.ne.s32.totalorder %s87, %s103
    %p105 = scmp.eq.s32.totalorder %s15, 0
    %p106 = por %p104, %p105
    %s107 = ssub.s32 %s16, %s28
    %s108 = ssub.s32 %s17, %s24
    %s109 = sor.u32 %s107, %s108
    %p110 = scmp.eq.s32.totalorder %s109, 0
    %s112 = sadd.s32 %s111, 1
    %s113 = scalar_select %p110, %s111, %s112
    %p116 = pneg %p110
    %p117 = scmp.eq.s32.totalorder %s9, 1
    %p118 = por %p116, %p117
    %p119 = scmp.ne.s32.totalorder %s111, %s114
    %p120 = scmp.eq.s32.totalorder %s9, 0
    %p121 = por %p119, %p120
    %p122 = scmp.ne.s32.totalorder %s111, %s114
    %p123 = scmp.eq.s32.totalorder %s14, 1
    %p124 = por %p122, %p123
    %p125 = scmp.ne.s32.totalorder %s114, %s115
    %p126 = scmp.eq.s32.totalorder %s14, 0
    %p127 = por %p125, %p126
    %p128 = scmp.ne.s32.totalorder %s114, %s115
    %p129 = scmp.eq.s32.totalorder %s15, 1
    %p130 = por %p128, %p129
    %p132 = scmp.ne.s32.totalorder %s115, %s131
    %p133 = scmp.eq.s32.totalorder %s15, 0
    %p134 = por %p132, %p133
    %p135 = scmp.le.s32.totalorder 1, %s9
    %p136 = scmp.lt.s32.totalorder %s9, 3
    %p137 = pnand %p135, %p136
    %p138 = pneg %p137
    // Predicated region
    $region9: #{conv_block_forward_nhwc.1} parent=5 // pred_check
      _
    $region10: #{conv_block_forward_nhwc.1} parent=5 // pred_check_branch
      %140 = sbr.rel (%p137) target = $region12
    $region11: #{conv_block_forward_nhwc.1} parent=5 // pred_region
      %s141 = ssub.s32 %s9, 1
      // Predicated region
      $region13: #{conv_block_forward_nhwc.1} parent=11 // pred_check
        %p142 = pneg %p73
      $region14: #{conv_block_forward_nhwc.1} parent=11 // pred_check_branch
        %144 = sbr.rel (%p142) target = $region16
      $region15: #{conv_block_forward_nhwc.1} parent=11 // pred_region
        %p145 = scmp.lt.s32.totalorder %s19, 0
        %s146 = scalar_select %p145, %s19, 0
        %s147 = smul.addr %s146, 8
        %s148 = scalar_lea.vmem %s1, %s147
      $region16: #{conv_block_forward_nhwc.1} parent=11 // pred_fallthru
        _
      // Predicated region
      $region17: #{conv_block_forward_nhwc.1} parent=11 // pred_check
        %p149 = pneg %p99
      $region18: #{conv_block_forward_nhwc.1} parent=11 // pred_check_branch
        %151 = sbr.rel (%p149) target = $region20
      $region19: #{conv_block_forward_nhwc.1} parent=11 // pred_region
        %p152 = scmp.lt.s32.totalorder %s19, 0
        %s153 = scalar_select %p152, %s19, 0
        %s154 = scalar_lea.vmem %s2, %s153
      $region20: #{conv_block_forward_nhwc.1} parent=11 // pred_fallthru
        _
    $region12: #{conv_block_forward_nhwc.1} parent=5 // pred_fallthru
      _
    %p155 = scmp.lt.s32.totalorder %s9, 2
    // Predicated region
    $region21: #{conv_block_forward_nhwc.1} parent=5 // pred_check
      %p156 = pneg %p155
    $region22: #{conv_block_forward_nhwc.1} parent=5 // pred_check_branch
      %158 = sbr.rel (%p156) target = $region24
    $region23: #{conv_block_forward_nhwc.1} parent=5 // pred_region
      // Predicated region
      $region25: #{conv_block_forward_nhwc.1} parent=23 // pred_check
        %p159 = pneg %p41
      $region26: #{conv_block_forward_nhwc.1} parent=23 // pred_check_branch
        %161 = sbr.rel (%p159) target = $region28
      $region27: #{conv_block_forward_nhwc.1} parent=23 // pred_region
        %s162 = smul.u32 32, %s16
        %p163 = scmp.lt.s32.totalorder %s162, 63
        %s164 = scalar_select %p163, %s162, 63
        %s165 = smul.addr %s164, 8
        %s166 = scalar_lea.vmem %s0, %s165
        %s167 = smul.u32 32, %s16
      $region28: #{conv_block_forward_nhwc.1} parent=23 // pred_fallthru
        _
    $region24: #{conv_block_forward_nhwc.1} parent=5 // pred_fallthru
      _
    %p168 = scmp.le.s32.totalorder 1, %s9
    %p169 = scmp.lt.s32.totalorder %s9, 3
    %p170 = pnand %p168, %p169
    %p171 = pneg %p170
    // Predicated region
    $region29: #{conv_block_forward_nhwc.1} parent=5 // pred_check
      _
    $region30: #{conv_block_forward_nhwc.1} parent=5 // pred_check_branch
      %173 = sbr.rel (%p170) target = $region32
    $region31: #{conv_block_forward_nhwc.1} parent=5 // pred_region
      %s174 = ssub.s32 %s9, 1
      %s175 = smul.u32 32, %s18
      %p176 = scmp.lt.s32.totalorder %s175, 63
      %s177 = scalar_select %p176, %s175, 63
      %s178 = smul.addr %s177, 8
      %s179 = scalar_lea.vmem %s0, %s178
      %p180 = pneg %p47
      %p181 = pneg %p44
      %p182 = scmp.lt.s32.totalorder %s19, 0
      %s183 = scalar_select %p182, %s19, 0
      %s184 = smul.addr %s183, 8
      %s185 = scalar_lea.vmem %s1, %s184
      %p186 = pneg %p73
      %p187 = pneg %p70
      %p188 = scmp.lt.s32.totalorder %s19, 0
      %s189 = scalar_select %p188, %s19, 0
      %s190 = scalar_lea.vmem %s2, %s189
      %p191 = pneg %p99
      %p192 = pneg %p96
      %p193 = pneg %p127
      %p194 = pneg %p124
      %s195 = smul.u32 32, %s18
      %p196 = scmp.lt.s32.totalorder %s195, 63
      %s197 = scalar_select %p196, %s195, 63
      %p198 = scmp.lt.s32.totalorder %s19, 0
      %s199 = scalar_select %p198, %s19, 0
      %s200 = sadd.s32 %s199, %s197
      %s201 = smul.addr %s200, 8
      %s202 = scalar_lea.vmem %s3, %s201
      %s203 = smul.u32 32, %s18
      %p204 = scmp.lt.s32.totalorder %s203, 63
      %s205 = scalar_select %p204, %s203, 63
      %s206 = smul.addr %s205, 8
      %s207 = scalar_lea.vmem %s0, %s206
      %s208 = smul.u32 32, %s18
      %p209 = scmp.lt.s32.totalorder %s19, 0
      %s210 = scalar_select %p209, %s19, 0
      %s211 = smul.addr %s210, 8
      %s212 = scalar_lea.vmem %s1, %s211
      %p213 = scmp.lt.s32.totalorder %s19, 0
      %s214 = scalar_select %p213, %s19, 0
      %s215 = scalar_lea.vmem %s2, %s214
      %s216 = smul.u32 32, %s18
      %p217 = scmp.lt.s32.totalorder %s216, 63
      %s218 = scalar_select %p217, %s216, 63
      %p219 = scmp.lt.s32.totalorder %s19, 0
      %s220 = scalar_select %p219, %s19, 0
      %s221 = sadd.s32 %s220, %s218
      %s222 = smul.addr %s221, 8
      %s223 = scalar_lea.vmem %s3, %s222
      %s224 = smul.u32 32, %s18
      %v225 = vld [vmem:[%s207] sm:$0xff]
      %v226 = vld [vmem:[%s207 + $0x8] sm:$0xff]
      %v227 = vld [vmem:[%s207 + $0x10] sm:$0xff]
      %v228 = vld [vmem:[%s207 + $0x18] sm:$0xff]
      %v229 = vld [vmem:[%s207 + $0x20] sm:$0xff]
      %v230 = vld [vmem:[%s207 + $0x28] sm:$0xff]
      %v231 = vld [vmem:[%s207 + $0x30] sm:$0xff]
      %v232 = vld [vmem:[%s207 + $0x38] sm:$0xff]
      %v233 = vld [vmem:[%s207 + $0x40] sm:$0xff]
      %v234 = vld [vmem:[%s207 + $0x48] sm:$0xff]
      %v235 = vld [vmem:[%s207 + $0x50] sm:$0xff]
      %v236 = vld [vmem:[%s207 + $0x58] sm:$0xff]
      %v237 = vld [vmem:[%s207 + $0x60] sm:$0xff]
      %v238 = vld [vmem:[%s207 + $0x68] sm:$0xff]
      %v239 = vld [vmem:[%s207 + $0x70] sm:$0xff]
      %v240 = vld [vmem:[%s207 + $0x78] sm:$0xff]
      %v241 = vld [vmem:[%s207 + $0x80] sm:$0xff]
      %v242 = vld [vmem:[%s207 + $0x88] sm:$0xff]
      %v243 = vld [vmem:[%s207 + $0x90] sm:$0xff]
      %v244 = vld [vmem:[%s207 + $0x98] sm:$0xff]
      %v245 = vld [vmem:[%s207 + $0xa0] sm:$0xff]
      %v246 = vld [vmem:[%s207 + $0xa8] sm:$0xff]
      %v247 = vld [vmem:[%s207 + $0xb0] sm:$0xff]
      %v248 = vld [vmem:[%s207 + $0xb8] sm:$0xff]
      %v249 = vld [vmem:[%s207 + $0xc0] sm:$0xff]
      %v250 = vld [vmem:[%s207 + $0xc8] sm:$0xff]
      %v251 = vld [vmem:[%s207 + $0xd0] sm:$0xff]
      %v252 = vld [vmem:[%s207 + $0xd8] sm:$0xff]
      %v253 = vld [vmem:[%s207 + $0xe0] sm:$0xff]
      %v254 = vld [vmem:[%s207 + $0xe8] sm:$0xff]
      %v255 = vld [vmem:[%s207 + $0xf0] sm:$0xff]
      %v256 = vld [vmem:[%s207 + $0xf8] sm:$0xff]
      %v257 = vld [vmem:[%s212] sm:$0xff]
      %v258 = vld [vmem:[%s212 + $0x8] sm:$0xff]
      %v259 = vld [vmem:[%s212 + $0x10] sm:$0xff]
      %v260 = vld [vmem:[%s212 + $0x18] sm:$0xff]
      %v261 = vld [vmem:[%s212 + $0x20] sm:$0xff]
      %v262 = vld [vmem:[%s212 + $0x28] sm:$0xff]
      %v263 = vld [vmem:[%s212 + $0x30] sm:$0xff]
      %v264 = vld [vmem:[%s212 + $0x38] sm:$0xff]
      %v265 = vld [vmem:[%s212 + $0x40] sm:$0xff]
      %v266 = vld [vmem:[%s212 + $0x48] sm:$0xff]
      %v267 = vld [vmem:[%s212 + $0x50] sm:$0xff]
      %v268 = vld [vmem:[%s212 + $0x58] sm:$0xff]
      %v269 = vld [vmem:[%s212 + $0x60] sm:$0xff]
      %v270 = vld [vmem:[%s212 + $0x68] sm:$0xff]
      %v271 = vld [vmem:[%s212 + $0x70] sm:$0xff]
      %v272 = vld [vmem:[%s212 + $0x78] sm:$0xff]
      %v273 = vld [vmem:[%s215] sm:$0x1]
      %v275 = vlaneseq
      %v276 = vshrl.u32 %v275, 7
      %v277 = vsub.s32 0, %v276
      %v278 = vrot.slane %v273, %v277
      %280 = vmatprep.subr.mxu0 0.0
      %281 = vmatpush1.msra.mxu0 %v257
      %282 = vmatprep.subr.mxu0 0.0
      %283 = vmatpush1.msra.mxu0 %v258
      %284 = vmatprep.subr.mxu0 0.0
      %285 = vmatpush1.msra.mxu0 %v259
      %286 = vmatprep.subr.mxu0 0.0
      %287 = vmatpush1.msra.mxu0 %v260
      %288 = vmatprep.subr.mxu0 0.0
      %289 = vmatpush1.msra.mxu0 %v261
      %290 = vmatprep.subr.mxu0 0.0
      %291 = vmatpush1.msra.mxu0 %v262
      %292 = vmatprep.subr.mxu0 0.0
      %293 = vmatpush1.msra.mxu0 %v263
      %294 = vmatprep.subr.mxu0 0.0
      %295 = vmatpush1.msra.mxu0 %v264
      %296 = vmatprep.subr.mxu0 0.0
      %297 = vmatpush1.msra.mxu0 %v265
      %298 = vmatprep.subr.mxu0 0.0
      %299 = vmatpush1.msra.mxu0 %v266
      %300 = vmatprep.subr.mxu0 0.0
      %301 = vmatpush1.msra.mxu0 %v267
      %302 = vmatprep.subr.mxu0 0.0
      %303 = vmatpush1.msra.mxu0 %v268
      %304 = vmatprep.subr.mxu0 0.0
      %305 = vmatpush1.msra.mxu0 %v269
      %306 = vmatprep.subr.mxu0 0.0
      %307 = vmatpush1.msra.mxu0 %v270
      %308 = vmatprep.subr.mxu0 0.0
      %309 = vmatpush1.msra.mxu0 %v271
      %310 = vmatprep.subr.mxu0 0.0
      %311 = vmatpush1.msra.mxu0 %v272
      %312 = vmatprep.subr.mxu0 0.0
      %313 = vmatpush1.msra.mxu0 0.0
      %314 = vmatprep.subr.mxu0 0.0
      %315 = vmatpush1.msra.mxu0 0.0
      %316 = vmatprep.subr.mxu0 0.0
      %317 = vmatpush1.msra.mxu0 0.0
      %318 = vmatprep.subr.mxu0 0.0
      %319 = vmatpush1.msra.mxu0 0.0
      %320 = vmatprep.subr.mxu0 0.0
      %321 = vmatpush1.msra.mxu0 0.0
      %322 = vmatprep.subr.mxu0 0.0
      %323 = vmatpush1.msra.mxu0 0.0
      %324 = vmatprep.subr.mxu0 0.0
      %325 = vmatpush1.msra.mxu0 0.0
      %326 = vmatprep.subr.mxu0 0.0
      %327 = vmatpush1.msra.mxu0 0.0
      %328 = vmatprep.subr.mxu0 0.0
      %329 = vmatpush1.msra.mxu0 0.0
      %330 = vmatprep.subr.mxu0 0.0
      %331 = vmatpush1.msra.mxu0 0.0
      %332 = vmatprep.subr.mxu0 0.0
      %333 = vmatpush1.msra.mxu0 0.0
      %334 = vmatprep.subr.mxu0 0.0
      %335 = vmatpush1.msra.mxu0 0.0
      %336 = vmatprep.subr.mxu0 0.0
      %337 = vmatpush1.msra.mxu0 0.0
      %338 = vmatprep.subr.mxu0 0.0
      %339 = vmatpush1.msra.mxu0 0.0
      %340 = vmatprep.subr.mxu0 0.0
      %341 = vmatpush1.msra.mxu0 0.0
      %342 = vmatprep.subr.mxu0 0.0
      %343 = vmatpush1.msra.mxu0 0.0
      %344 = vmatprep.mubr.f32.mxu0 0.0
      %345 = vmatmul.mubr.f32.gmra.mrb[0].mxu0 %v225
      %v346 = vpop.f32.mrb[0].mxu0
      %v347 = vadd.f32 %v278, %v346
      %v348 = vpop.f32.mrb[0].mxu0
      %349 = vmatprep.mubr.f32.mxu0 0.0
      %350 = vmatmul.mubr.f32.gmra.mrb[0].mxu0 %v226
      %v351 = vpop.f32.mrb[0].mxu0
      %v352 = vadd.f32 %v278, %v351
      %v353 = vpop.f32.mrb[0].mxu0
      %354 = vmatprep.mubr.f32.mxu0 0.0
      %355 = vmatmul.mubr.f32.gmra.mrb[0].mxu0 %v227
      %v356 = vpop.f32.mrb[0].mxu0
      %v357 = vadd.f32 %v278, %v356
      %v358 = vpop.f32.mrb[0].mxu0
      %359 = vmatprep.mubr.f32.mxu0 0.0
      %360 = vmatmul.mubr.f32.gmra.mrb[0].mxu0 %v228
      %v361 = vpop.f32.mrb[0].mxu0
      %v362 = vadd.f32 %v278, %v361
      %v363 = vpop.f32.mrb[0].mxu0
      %364 = vmatprep.mubr.f32.mxu0 0.0
      %365 = vmatmul.mubr.f32.gmra.mrb[0].mxu0 %v229
      %v366 = vpop.f32.mrb[0].mxu0
      %v367 = vadd.f32 %v278, %v366
      %v368 = vpop.f32.mrb[0].mxu0
      %369 = vmatprep.mubr.f32.mxu0 0.0
      %370 = vmatmul.mubr.f32.gmra.mrb[0].mxu0 %v230
      %v371 = vpop.f32.mrb[0].mxu0
      %v372 = vadd.f32 %v278, %v371
      %v373 = vpop.f32.mrb[0].mxu0
      %374 = vmatprep.mubr.f32.mxu0 0.0
      %375 = vmatmul.mubr.f32.gmra.mrb[0].mxu0 %v231
      %v376 = vpop.f32.mrb[0].mxu0
      %v377 = vadd.f32 %v278, %v376
      %v378 = vpop.f32.mrb[0].mxu0
      %379 = vmatprep.mubr.f32.mxu0 0.0
      %380 = vmatmul.mubr.f32.gmra.mrb[0].mxu0 %v232
      %v381 = vpop.f32.mrb[0].mxu0
      %v382 = vadd.f32 %v278, %v381
      %v383 = vpop.f32.mrb[0].mxu0
      %384 = vmatprep.mubr.f32.mxu0 0.0
      %385 = vmatmul.mubr.f32.gmra.mrb[0].mxu0 %v233
      %v386 = vpop.f32.mrb[0].mxu0
      %v387 = vadd.f32 %v278, %v386
      %v388 = vpop.f32.mrb[0].mxu0
      %389 = vmatprep.mubr.f32.mxu0 0.0
      %390 = vmatmul.mubr.f32.gmra.mrb[0].mxu0 %v234
      %v391 = vpop.f32.mrb[0].mxu0
      %v392 = vadd.f32 %v278, %v391
      %v393 = vpop.f32.mrb[0].mxu0
      %394 = vmatprep.mubr.f32.mxu0 0.0
      %395 = vmatmul.mubr.f32.gmra.mrb[0].mxu0 %v235
      %v396 = vpop.f32.mrb[0].mxu0
      %v397 = vadd.f32 %v278, %v396
      %v398 = vpop.f32.mrb[0].mxu0
      %399 = vmatprep.mubr.f32.mxu0 0.0
      %400 = vmatmul.mubr.f32.gmra.mrb[0].mxu0 %v236
      %v401 = vpop.f32.mrb[0].mxu0
      %v402 = vadd.f32 %v278, %v401
      %v403 = vpop.f32.mrb[0].mxu0
      %404 = vmatprep.mubr.f32.mxu0 0.0
      %405 = vmatmul.mubr.f32.gmra.mrb[0].mxu0 %v237
      %v406 = vpop.f32.mrb[0].mxu0
      %v407 = vadd.f32 %v278, %v406
      %v408 = vpop.f32.mrb[0].mxu0
      %409 = vmatprep.mubr.f32.mxu0 0.0
      %410 = vmatmul.mubr.f32.gmra.mrb[0].mxu0 %v238
      %v411 = vpop.f32.mrb[0].mxu0
      %v412 = vadd.f32 %v278, %v411
      %v413 = vpop.f32.mrb[0].mxu0
      %414 = vmatprep.mubr.f32.mxu0 0.0
      %415 = vmatmul.mubr.f32.gmra.mrb[0].mxu0 %v239
      %v416 = vpop.f32.mrb[0].mxu0
      %v417 = vadd.f32 %v278, %v416
      %v418 = vpop.f32.mrb[0].mxu0
      %419 = vmatprep.mubr.f32.mxu0 0.0
      %420 = vmatmul.mubr.f32.gmra.mrb[0].mxu0 %v240
      %v421 = vpop.f32.mrb[0].mxu0
      %v422 = vadd.f32 %v278, %v421
      %v423 = vpop.f32.mrb[0].mxu0
      %424 = vmatprep.mubr.f32.mxu0 0.0
      %425 = vmatmul.mubr.f32.gmra.mrb[0].mxu0 %v241
      %v426 = vpop.f32.mrb[0].mxu0
      %v427 = vadd.f32 %v278, %v426
      %v428 = vpop.f32.mrb[0].mxu0
      %429 = vmatprep.mubr.f32.mxu0 0.0
      %430 = vmatmul.mubr.f32.gmra.mrb[0].mxu0 %v242
      %v431 = vpop.f32.mrb[0].mxu0
      %v432 = vadd.f32 %v278, %v431
      %v433 = vpop.f32.mrb[0].mxu0
      %434 = vmatprep.mubr.f32.mxu0 0.0
      %435 = vmatmul.mubr.f32.gmra.mrb[0].mxu0 %v243
      %v436 = vpop.f32.mrb[0].mxu0
      %v437 = vadd.f32 %v278, %v436
      %v438 = vpop.f32.mrb[0].mxu0
      %439 = vmatprep.mubr.f32.mxu0 0.0
      %440 = vmatmul.mubr.f32.gmra.mrb[0].mxu0 %v244
      %v441 = vpop.f32.mrb[0].mxu0
      %v442 = vadd.f32 %v278, %v441
      %v443 = vpop.f32.mrb[0].mxu0
      %444 = vmatprep.mubr.f32.mxu0 0.0
      %445 = vmatmul.mubr.f32.gmra.mrb[0].mxu0 %v245
      %v446 = vpop.f32.mrb[0].mxu0
      %v447 = vadd.f32 %v278, %v446
      %v448 = vpop.f32.mrb[0].mxu0
      %449 = vmatprep.mubr.f32.mxu0 0.0
      %450 = vmatmul.mubr.f32.gmra.mrb[0].mxu0 %v246
      %v451 = vpop.f32.mrb[0].mxu0
      %v452 = vadd.f32 %v278, %v451
      %v453 = vpop.f32.mrb[0].mxu0
      %454 = vmatprep.mubr.f32.mxu0 0.0
      %455 = vmatmul.mubr.f32.gmra.mrb[0].mxu0 %v247
      %v456 = vpop.f32.mrb[0].mxu0
      %v457 = vadd.f32 %v278, %v456
      %v458 = vpop.f32.mrb[0].mxu0
      %459 = vmatprep.mubr.f32.mxu0 0.0
      %460 = vmatmul.mubr.f32.gmra.mrb[0].mxu0 %v248
      %v461 = vpop.f32.mrb[0].mxu0
      %v462 = vadd.f32 %v278, %v461
      %v463 = vpop.f32.mrb[0].mxu0
      %464 = vmatprep.mubr.f32.mxu0 0.0
      %465 = vmatmul.mubr.f32.gmra.mrb[0].mxu0 %v249
      %v466 = vpop.f32.mrb[0].mxu0
      %v467 = vadd.f32 %v278, %v466
      %v468 = vpop.f32.mrb[0].mxu0
      %469 = vmatprep.mubr.f32.mxu0 0.0
      %470 = vmatmul.mubr.f32.gmra.mrb[0].mxu0 %v250
      %v471 = vpop.f32.mrb[0].mxu0
      %v472 = vadd.f32 %v278, %v471
      %v473 = vpop.f32.mrb[0].mxu0
      %474 = vmatprep.mubr.f32.mxu0 0.0
      %475 = vmatmul.mubr.f32.gmra.mrb[0].mxu0 %v251
      %v476 = vpop.f32.mrb[0].mxu0
      %v477 = vadd.f32 %v278, %v476
      %v478 = vpop.f32.mrb[0].mxu0
      %479 = vmatprep.mubr.f32.mxu0 0.0
      %480 = vmatmul.mubr.f32.gmra.mrb[0].mxu0 %v252
      %v481 = vpop.f32.mrb[0].mxu0
      %v482 = vadd.f32 %v278, %v481
      %v483 = vpop.f32.mrb[0].mxu0
      %484 = vmatprep.mubr.f32.mxu0 0.0
      %485 = vmatmul.mubr.f32.gmra.mrb[0].mxu0 %v253
      %v486 = vpop.f32.mrb[0].mxu0
      %v487 = vadd.f32 %v278, %v486
      %v488 = vpop.f32.mrb[0].mxu0
      %489 = vmatprep.mubr.f32.mxu0 0.0
      %490 = vmatmul.mubr.f32.gmra.mrb[0].mxu0 %v254
      %v491 = vpop.f32.mrb[0].mxu0
      %v492 = vadd.f32 %v278, %v491
      %v493 = vpop.f32.mrb[0].mxu0
      %494 = vmatprep.mubr.f32.mxu0 0.0
      %495 = vmatmul.mubr.f32.gmra.mrb[0].mxu0 %v255
      %v496 = vpop.f32.mrb[0].mxu0
      %v497 = vadd.f32 %v278, %v496
      %v498 = vpop.f32.mrb[0].mxu0
      %499 = vmatprep.mubr.f32.mxu0 0.0
      %500 = vmatmul.mubr.f32.gmra.mrb[0].mxu0 %v256
      %v501 = vpop.f32.mrb[0].mxu0
      %v502 = vadd.f32 %v278, %v501
      %v503 = vpop.f32.mrb[0].mxu0
      %504 = vdwg.mxu0
      %v505 = vmax.f32 %v347, 0.0
      %v506 = vmax.f32 %v352, 0.0
      %v507 = vmax.f32 %v357, 0.0
      %v508 = vmax.f32 %v362, 0.0
      %v509 = vmax.f32 %v367, 0.0
      %v510 = vmax.f32 %v372, 0.0
      %v511 = vmax.f32 %v377, 0.0
      %v512 = vmax.f32 %v382, 0.0
      %v513 = vmax.f32 %v387, 0.0
      %v514 = vmax.f32 %v392, 0.0
      %v515 = vmax.f32 %v397, 0.0
      %v516 = vmax.f32 %v402, 0.0
      %v517 = vmax.f32 %v407, 0.0
      %v518 = vmax.f32 %v412, 0.0
      %v519 = vmax.f32 %v417, 0.0
      %v520 = vmax.f32 %v422, 0.0
      %v521 = vmax.f32 %v427, 0.0
      %v522 = vmax.f32 %v432, 0.0
      %v523 = vmax.f32 %v437, 0.0
      %v524 = vmax.f32 %v442, 0.0
      %v525 = vmax.f32 %v447, 0.0
      %v526 = vmax.f32 %v452, 0.0
      %v527 = vmax.f32 %v457, 0.0
      %v528 = vmax.f32 %v462, 0.0
      %v529 = vmax.f32 %v467, 0.0
      %v530 = vmax.f32 %v472, 0.0
      %v531 = vmax.f32 %v477, 0.0
      %v532 = vmax.f32 %v482, 0.0
      %v533 = vmax.f32 %v487, 0.0
      %v534 = vmax.f32 %v492, 0.0
      %v535 = vmax.f32 %v497, 0.0
      %v536 = vmax.f32 %v502, 0.0
      %v537 = vmin.f32 %v505, 6.0
      %v538 = vmin.f32 %v506, 6.0
      %v539 = vmin.f32 %v507, 6.0
      %v540 = vmin.f32 %v508, 6.0
      %v541 = vmin.f32 %v509, 6.0
      %v542 = vmin.f32 %v510, 6.0
      %v543 = vmin.f32 %v511, 6.0
      %v544 = vmin.f32 %v512, 6.0
      %v545 = vmin.f32 %v513, 6.0
      %v546 = vmin.f32 %v514, 6.0
      %v547 = vmin.f32 %v515, 6.0
      %v548 = vmin.f32 %v516, 6.0
      %v549 = vmin.f32 %v517, 6.0
      %v550 = vmin.f32 %v518, 6.0
      %v551 = vmin.f32 %v519, 6.0
      %v552 = vmin.f32 %v520, 6.0
      %v553 = vmin.f32 %v521, 6.0
      %v554 = vmin.f32 %v522, 6.0
      %v555 = vmin.f32 %v523, 6.0
      %v556 = vmin.f32 %v524, 6.0
      %v557 = vmin.f32 %v525, 6.0
      %v558 = vmin.f32 %v526, 6.0
      %v559 = vmin.f32 %v527, 6.0
      %v560 = vmin.f32 %v528, 6.0
      %v561 = vmin.f32 %v529, 6.0
      %v562 = vmin.f32 %v530, 6.0
      %v563 = vmin.f32 %v531, 6.0
      %v564 = vmin.f32 %v532, 6.0
      %v565 = vmin.f32 %v533, 6.0
      %v566 = vmin.f32 %v534, 6.0
      %v567 = vmin.f32 %v535, 6.0
      %v568 = vmin.f32 %v536, 6.0
      %569 = vst [vmem:[%s223] sm:$0xff] %v537
      %570 = vst [vmem:[%s223 + $0x8] sm:$0xff] %v538
      %571 = vst [vmem:[%s223 + $0x10] sm:$0xff] %v539
      %572 = vst [vmem:[%s223 + $0x18] sm:$0xff] %v540
      %573 = vst [vmem:[%s223 + $0x20] sm:$0xff] %v541
      %574 = vst [vmem:[%s223 + $0x28] sm:$0xff] %v542
      %575 = vst [vmem:[%s223 + $0x30] sm:$0xff] %v543
      %576 = vst [vmem:[%s223 + $0x38] sm:$0xff] %v544
      %577 = vst [vmem:[%s223 + $0x40] sm:$0xff] %v545
      %578 = vst [vmem:[%s223 + $0x48] sm:$0xff] %v546
      %579 = vst [vmem:[%s223 + $0x50] sm:$0xff] %v547
      %580 = vst [vmem:[%s223 + $0x58] sm:$0xff] %v548
      %581 = vst [vmem:[%s223 + $0x60] sm:$0xff] %v549
      %582 = vst [vmem:[%s223 + $0x68] sm:$0xff] %v550
      %583 = vst [vmem:[%s223 + $0x70] sm:$0xff] %v551
      %584 = vst [vmem:[%s223 + $0x78] sm:$0xff] %v552
      %585 = vst [vmem:[%s223 + $0x80] sm:$0xff] %v553
      %586 = vst [vmem:[%s223 + $0x88] sm:$0xff] %v554
      %587 = vst [vmem:[%s223 + $0x90] sm:$0xff] %v555
      %588 = vst [vmem:[%s223 + $0x98] sm:$0xff] %v556
      %589 = vst [vmem:[%s223 + $0xa0] sm:$0xff] %v557
      %590 = vst [vmem:[%s223 + $0xa8] sm:$0xff] %v558
      %591 = vst [vmem:[%s223 + $0xb0] sm:$0xff] %v559
      %592 = vst [vmem:[%s223 + $0xb8] sm:$0xff] %v560
      %593 = vst [vmem:[%s223 + $0xc0] sm:$0xff] %v561
      %594 = vst [vmem:[%s223 + $0xc8] sm:$0xff] %v562
      %595 = vst [vmem:[%s223 + $0xd0] sm:$0xff] %v563
      %596 = vst [vmem:[%s223 + $0xd8] sm:$0xff] %v564
      %597 = vst [vmem:[%s223 + $0xe0] sm:$0xff] %v565
      %598 = vst [vmem:[%s223 + $0xe8] sm:$0xff] %v566
      %599 = vst [vmem:[%s223 + $0xf0] sm:$0xff] %v567
      %600 = vst [vmem:[%s223 + $0xf8] sm:$0xff] %v568
      %s601 = smul.u32 32, %s18
      %p602 = scmp.lt.s32.totalorder %s601, 63
      %s603 = scalar_select %p602, %s601, 63
      %p604 = scmp.lt.s32.totalorder %s19, 0
      %s605 = scalar_select %p604, %s19, 0
      %s606 = sadd.s32 %s605, %s603
      %s607 = smul.addr %s606, 8
      %s608 = scalar_lea.vmem %s3, %s607
      // Predicated region
      $region33: #{conv_block_forward_nhwc.1} parent=31 // pred_check
        %p609 = pneg %p124
      $region34: #{conv_block_forward_nhwc.1} parent=31 // pred_check_branch
        %611 = sbr.rel (%p609) target = $region36
      $region35: #{conv_block_forward_nhwc.1} parent=31 // pred_region
        %s612 = smul.u32 32, %s18
      $region36: #{conv_block_forward_nhwc.1} parent=31 // pred_fallthru
        _
    $region32: #{conv_block_forward_nhwc.1} parent=5 // pred_fallthru
      _
    %p613 = scmp.le.s32.totalorder 2, %s9
    // Predicated region
    $region37: #{conv_block_forward_nhwc.1} parent=5 // pred_check
      %p614 = pneg %p613
    $region38: #{conv_block_forward_nhwc.1} parent=5 // pred_check_branch
      %616 = sbr.rel (%p614) target = $region40
    $region39: #{conv_block_forward_nhwc.1} parent=5 // pred_region
      %s617 = ssub.s32 %s9, 2
      // Predicated region
      $region41: #{conv_block_forward_nhwc.1} parent=39 // pred_check
        %p618 = pneg %p130
      $region42: #{conv_block_forward_nhwc.1} parent=39 // pred_check_branch
        %620 = sbr.rel (%p618) target = $region44
      $region43: #{conv_block_forward_nhwc.1} parent=39 // pred_region
        %s621 = smul.u32 32, %s20
        %p622 = scmp.lt.s32.totalorder %s621, 63
        %s623 = scalar_select %p622, %s621, 63
        %p624 = scmp.lt.s32.totalorder %s21, 0
        %s625 = scalar_select %p624, %s21, 0
        %s626 = sadd.s32 %s625, %s623
        %s627 = smul.addr %s626, 8
        %s628 = scalar_lea.vmem %s3, %s627
      $region44: #{conv_block_forward_nhwc.1} parent=39 // pred_fallthru
        _
    $region40: #{conv_block_forward_nhwc.1} parent=5 // pred_fallthru
      _
  $region6: #{conv_block_forward_nhwc.1} parent=0 // loop_footer
    %s13 = sadd.s32 1, %s9
  $region7: #{conv_block_forward_nhwc.1} parent=0 // loop_footer_branch
    %8 = sbr.rel target = $region3
  $region8: #{conv_block_forward_nhwc.1} parent=0 // loop_exit
    _

</llo_original>
